<compile_context>
chip_gen: v6e
topology: v6e:2x2x1
jax: 0.10.0
libtpu: 0.0.40
codegen_flags: <defaults>
</compile_context>

<pallas_src>
import functools
import math

import jax
import jax.numpy as jnp
from jax import lax
from jax.experimental import pallas as pl
from jax.experimental.pallas import tpu as pltpu


def _round_up(x: int, m: int) -> int:
    return (x + m - 1) // m * m


def _norm_conv_kernel(x_ref, w_ref, b_ref, o_ref, *,
                      B: int, K: int, Wp: int, span_pad: int,
                      inv_cin: float, eps: float, neg_slope: float):
    """Fused PixelNorm -> im2col -> single MXU matmul -> WScale bias -> LeakyReLU.

    x_ref: (B, C_in_pad, Lseg)        f32, zero-padded, row-flattened inputs
    w_ref: (C_out_pad, K*K*C_in_pad)  bf16, tap-major, WScale scale folded in
    b_ref: (C_out_pad, 1)             f32 WScale bias
    o_ref: (B, C_out_pad, span_pad)   f32, lane-dense output slab
    """
    w = w_ref[...]                                   # resident bf16 weights
    b = b_ref[...]                                   # (C_out_pad, 1)

    for bi in range(B):                              # static, small batch tile
        x = x_ref[bi]                                # (C_in_pad, Lseg)

        # --- PixelNormLayer: mean over TRUE C_in (padded channels are zero) ---
        ms = jnp.sum(x * x, axis=0, keepdims=True) * inv_cin   # (1, Lseg)
        xn = x * lax.rsqrt(ms + eps)                            # (C_in_pad, Lseg)

        # --- im2col: stack the K*K shifted lane-slices along the contraction
        #     axis -> (K*K*C_in_pad, span_pad), then ONE MXU matmul. ---
        slab = jnp.concatenate(
            [xn[:, dy * Wp + dx: dy * Wp + dx + span_pad]
             for dy in range(K) for dx in range(K)],
            axis=0).astype(jnp.bfloat16)

        y = jnp.dot(w, slab, preferred_element_type=jnp.float32)  # (C_out_pad, span_pad)

        # --- WScale bias (scale already folded into w) + LeakyReLU(0.2) ---
        y = y + b
        y = jnp.where(y >= 0, y, neg_slope * y)
        o_ref[bi] = y.astype(o_ref.dtype)


def norm_conv_block(x, weight, bias, *, kernel_size: int, padding: int,
                    epsilon: float = 1e-8, negative_slope: float = 0.2):
    """Forward pass of NormConvBlock for NCHW float32 inputs (stride 1)."""
    N, C_in, H, W = x.shape
    C_out = weight.shape[0]
    K, p = int(kernel_size), int(padding)

    H_out, W_out = H + 2 * p - K + 1, W + 2 * p - K + 1
    assert H_out > 0 and W_out > 0, "kernel larger than padded input"
    Hp, Wp = H + 2 * p, W + 2 * p

    span = H_out * Wp                        # output positions over (H_out, Wp)
    span_pad = _round_up(span, 128)          # lane-dense output slab
    max_off = (K - 1) * Wp + (K - 1)         # largest tap offset
    Lseg = _round_up(span_pad + max_off, 128)  # every shifted slice stays in-bounds

    C_in_pad = _round_up(C_in, 8)            # f32 sublane multiple
    C_out_pad = _round_up(C_out, 8)

    # --- Layout plumbing (cheap, done once by XLA) ---
    xp = jnp.pad(x, ((0, 0), (0, C_in_pad - C_in), (p, p), (p, p)))
    xf = xp.reshape(N, C_in_pad, Hp * Wp)
    xf = jnp.pad(xf, ((0, 0), (0, 0), (0, Lseg - Hp * Wp)))       # (N, Cip, Lseg)

    # WScaleLayer scale (gain = sqrt(2)/K, fan_in = C_in) folded into weights.
    wscale = (math.sqrt(2.0) / K) / math.sqrt(C_in)
    wpad = jnp.pad(weight, ((0, C_out_pad - C_out), (0, C_in_pad - C_in),
                            (0, 0), (0, 0)))                      # (Cop, Cip, K, K)
    w2 = (jnp.transpose(wpad, (0, 2, 3, 1))                       # (Cop, K, K, Cip)
          .reshape(C_out_pad, K * K * C_in_pad) * wscale).astype(jnp.bfloat16)
    b2 = jnp.pad(bias, (0, C_out_pad - C_out)).reshape(C_out_pad, 1).astype(jnp.float32)

    # --- Batch tile: several small images per grid step (>= wide pipeline steps) ---
    per_img_in = C_in_pad * Lseg * 4
    per_img_out = C_out_pad * span_pad * 4
    budget = 4 << 20
    B_tile = max(1, min(N, budget // max(per_img_in + per_img_out, 1)))
    while N % B_tile:
        B_tile -= 1

    # --- Explicit VMEM budget: double-buffered I/O blocks + weights + slab ---
    slab_bytes = K * K * C_in_pad * span_pad * (4 + 2)   # f32 concat + bf16 copy
    vmem_bytes = (2 * B_tile * (per_img_in + per_img_out)
                  + w2.size * 2 + b2.size * 4
                  + slab_bytes + C_out_pad * span_pad * 4 + (2 << 20))
    vmem_bytes = int(min(max(vmem_bytes, 4 << 20), 48 << 20))

    kernel = functools.partial(
        _norm_conv_kernel, B=B_tile, K=K, Wp=Wp, span_pad=span_pad,
        inv_cin=1.0 / C_in, eps=float(epsilon),
        neg_slope=float(negative_slope))

    flops = 2 * N * (K * K * C_in_pad) * C_out_pad * span_pad
    bytes_accessed = (xf.size * 4 + w2.size * 2 + b2.size * 4
                      + N * C_out_pad * span_pad * 4)

    out_flat = pl.pallas_call(
        kernel,
        out_shape=jax.ShapeDtypeStruct((N, C_out_pad, span_pad), x.dtype),
        grid=(N // B_tile,),
        in_specs=[
            pl.BlockSpec((B_tile, C_in_pad, Lseg), lambda n: (n, 0, 0)),
            pl.BlockSpec((C_out_pad, K * K * C_in_pad), lambda n: (0, 0)),
            pl.BlockSpec((C_out_pad, 1), lambda n: (0, 0)),
        ],
        out_specs=pl.BlockSpec((B_tile, C_out_pad, span_pad), lambda n: (n, 0, 0)),
        compiler_params=pltpu.CompilerParams(
            dimension_semantics=("parallel",),
            vmem_limit_bytes=vmem_bytes),
        cost_estimate=pl.CostEstimate(
            flops=flops, transcendentals=N * Lseg,
            bytes_accessed=bytes_accessed),
    )(xf, w2, b2)

    # (N, Cop, span_pad) -> true channels/span -> (N, C_out, H_out, Wp) -> drop pad cols.
    out = out_flat[:, :C_out, :span].reshape(N, C_out, H_out, Wp)[:, :, :, :W_out]
    return out


def _reference(x, weight, bias, *, kernel_size, padding,
               epsilon=1e-8, negative_slope=0.2):
    """Pure-JAX reference matching the PyTorch module."""
    xn = x / jnp.sqrt(jnp.mean(x * x, axis=1, keepdims=True) + epsilon)
    y = lax.conv_general_dilated(
        xn, weight, window_strides=(1, 1),
        padding=((padding, padding), (padding, padding)),
        dimension_numbers=("NCHW", "OIHW", "NCHW"),
        precision=lax.Precision.HIGHEST)
    scale = (math.sqrt(2.0) / kernel_size) / math.sqrt(x.shape[1])
    y = y * scale + bias.reshape(1, -1, 1, 1)
    return jnp.where(y >= 0, y, negative_slope * y)


if __name__ == "__main__":
    key = jax.random.PRNGKey(0)
    kx, kw, kb = jax.random.split(key, 3)

    N, C_in, H, W = 2, 4, 16, 16
    C_out, K, P = 8, 3, 1

    x = jax.random.normal(kx, (N, C_in, H, W), dtype=jnp.float32)
    weight = jax.random.normal(kw, (C_out, C_in, K, K), dtype=jnp.float32) * 0.1
    bias = jax.random.normal(kb, (C_out,), dtype=jnp.float32)

    y = norm_conv_block(x, weight, bias, kernel_size=K, padding=P)
    y = jax.block_until_ready(y)

    ref = _reference(x, weight, bias, kernel_size=K, padding=P)
    assert y.shape == (N, C_out, H, W), y.shape
    max_err = float(jnp.max(jnp.abs(y - ref)))
    assert max_err < 1e-2, f"mismatch vs reference, max abs err = {max_err}"

    print("KERNEL_OK")
</pallas_src>

<mosaic_0001>
module attributes {stable_mosaic.version = 11 : i64} {
  func.func @_norm_conv_kernel(%arg0: i32, %arg1: memref<2x8x512xf32, #tpu.memory_space<vmem>>, %arg2: memref<8x72xbf16, #tpu.memory_space<vmem>>, %arg3: memref<8x1xf32, #tpu.memory_space<vmem>>, %arg4: memref<2x8x384xf32, #tpu.memory_space<vmem>>) attributes {dimension_semantics = [#tpu.dimension_semantics<parallel>], iteration_bounds = array<i64: 1>, scalar_prefetch = 0 : i64, scratch_operands = 0 : i64, tpu.core_type = #tpu.core_type<tc>, window_params = [{transform_indices = @transform_0, window_bounds = array<i64: 2, 8, 512>}, {pipeline_mode = #tpu.pipeline_mode<synchronous>, transform_indices = @transform_1, window_bounds = array<i64: 8, 72>}, {pipeline_mode = #tpu.pipeline_mode<synchronous>, transform_indices = @transform_2, window_bounds = array<i64: 8, 1>}, {transform_indices = @transform_3, window_bounds = array<i64: 2, 8, 384>}]} {
    %c0 = arith.constant 0 : index
    %c0_0 = arith.constant 0 : index
    %0 = vector.load %arg2[%c0, %c0_0] : memref<8x72xbf16, #tpu.memory_space<vmem>>, vector<8x72xbf16>
    %c0_1 = arith.constant 0 : index
    %c0_2 = arith.constant 0 : index
    %1 = vector.load %arg3[%c0_1, %c0_2] : memref<8x1xf32, #tpu.memory_space<vmem>>, vector<8x1xf32>
    %c0_3 = arith.constant 0 : index
    %c0_4 = arith.constant 0 : index
    %c0_5 = arith.constant 0 : index
    %2 = vector.load %arg1[%c0_3, %c0_4, %c0_5] : memref<2x8x512xf32, #tpu.memory_space<vmem>>, vector<1x8x512xf32>
    %3 = vector.shape_cast %2 : vector<1x8x512xf32> to vector<8x512xf32>
    %4 = arith.mulf %3, %3 : vector<8x512xf32>
    %cst = arith.constant dense<0.000000e+00> : vector<512xf32>
    %5 = vector.multi_reduction <add>, %4, %cst [0] : vector<8x512xf32> to vector<512xf32>
    %6 = vector.shape_cast %5 : vector<512xf32> to vector<1x512xf32>
    %cst_6 = arith.constant 2.500000e-01 : f32
    %7 = vector.broadcast %cst_6 : f32 to vector<1x512xf32>
    %8 = arith.mulf %6, %7 : vector<1x512xf32>
    %cst_7 = arith.constant 9.99999993E-9 : f32
    %9 = vector.broadcast %cst_7 : f32 to vector<1x512xf32>
    %10 = arith.addf %8, %9 : vector<1x512xf32>
    %11 = math.rsqrt %10 : vector<1x512xf32>
    %12 = vector.broadcast %11 : vector<1x512xf32> to vector<8x512xf32>
    %13 = arith.mulf %3, %12 : vector<8x512xf32>
    %14 = vector.extract_strided_slice %13 {offsets = [0, 0], sizes = [8, 384], strides = [1, 1]} : vector<8x512xf32> to vector<8x384xf32>
    %15 = vector.extract_strided_slice %13 {offsets = [0, 1], sizes = [8, 384], strides = [1, 1]} : vector<8x512xf32> to vector<8x384xf32>
    %16 = vector.extract_strided_slice %13 {offsets = [0, 2], sizes = [8, 384], strides = [1, 1]} : vector<8x512xf32> to vector<8x384xf32>
    %17 = vector.extract_strided_slice %13 {offsets = [0, 18], sizes = [8, 384], strides = [1, 1]} : vector<8x512xf32> to vector<8x384xf32>
    %18 = vector.extract_strided_slice %13 {offsets = [0, 19], sizes = [8, 384], strides = [1, 1]} : vector<8x512xf32> to vector<8x384xf32>
    %19 = vector.extract_strided_slice %13 {offsets = [0, 20], sizes = [8, 384], strides = [1, 1]} : vector<8x512xf32> to vector<8x384xf32>
    %20 = vector.extract_strided_slice %13 {offsets = [0, 36], sizes = [8, 384], strides = [1, 1]} : vector<8x512xf32> to vector<8x384xf32>
    %21 = vector.extract_strided_slice %13 {offsets = [0, 37], sizes = [8, 384], strides = [1, 1]} : vector<8x512xf32> to vector<8x384xf32>
    %22 = vector.extract_strided_slice %13 {offsets = [0, 38], sizes = [8, 384], strides = [1, 1]} : vector<8x512xf32> to vector<8x384xf32>
    %23 = tpu.concatenate %14, %15, %16, %17, %18, %19, %20, %21, %22 in 0 : vector<8x384xf32>, vector<8x384xf32>, vector<8x384xf32>, vector<8x384xf32>, vector<8x384xf32>, vector<8x384xf32>, vector<8x384xf32>, vector<8x384xf32>, vector<8x384xf32> -> vector<72x384xf32>
    %24 = arith.truncf %23 : vector<72x384xf32> to vector<72x384xbf16>
    %cst_8 = arith.constant dense<0.000000e+00> : vector<8x384xf32>
    %25 = tpu.matmul %0, %24, %cst_8 {dimension_numbers = #tpu.dot_dimension_numbers<[1], [0], [0], [1], [0, 0, 1, 1], [], []>} : vector<8x72xbf16>, vector<72x384xbf16>, vector<8x384xf32> -> vector<8x384xf32>
    %26 = vector.broadcast %1 : vector<8x1xf32> to vector<8x384xf32>
    %27 = arith.addf %25, %26 : vector<8x384xf32>
    %cst_9 = arith.constant 0.000000e+00 : f32
    %28 = vector.broadcast %cst_9 : f32 to vector<8x384xf32>
    %29 = arith.cmpf oge, %27, %28 : vector<8x384xf32>
    %cst_10 = arith.constant 2.000000e-01 : f32
    %30 = vector.broadcast %cst_10 : f32 to vector<8x384xf32>
    %31 = arith.mulf %30, %27 : vector<8x384xf32>
    %32 = arith.select %29, %27, %31 : vector<8x384xi1>, vector<8x384xf32>
    %c0_11 = arith.constant 0 : index
    %c0_12 = arith.constant 0 : index
    %c0_13 = arith.constant 0 : index
    %33 = vector.load %arg4[%c0_11, %c0_12, %c0_13] : memref<2x8x384xf32, #tpu.memory_space<vmem>>, vector<1x8x384xf32>
    %34 = vector.shape_cast %33 : vector<1x8x384xf32> to vector<8x384xf32>
    %35 = vector.shape_cast %32 : vector<8x384xf32> to vector<1x8x384xf32>
    tpu.vector_store %arg4[%c0_11, %c0_12, %c0_13], %35 {strides = array<i32>} : memref<2x8x384xf32, #tpu.memory_space<vmem>>, vector<1x8x384xf32>,
    %c1 = arith.constant 1 : index
    %c0_14 = arith.constant 0 : index
    %c0_15 = arith.constant 0 : index
    %36 = vector.load %arg1[%c1, %c0_14, %c0_15] : memref<2x8x512xf32, #tpu.memory_space<vmem>>, vector<1x8x512xf32>
    %37 = vector.shape_cast %36 : vector<1x8x512xf32> to vector<8x512xf32>
    %38 = arith.mulf %37, %37 : vector<8x512xf32>
    %cst_16 = arith.constant dense<0.000000e+00> : vector<512xf32>
    %39 = vector.multi_reduction <add>, %38, %cst_16 [0] : vector<8x512xf32> to vector<512xf32>
    %40 = vector.shape_cast %39 : vector<512xf32> to vector<1x512xf32>
    %cst_17 = arith.constant 2.500000e-01 : f32
    %41 = vector.broadcast %cst_17 : f32 to vector<1x512xf32>
    %42 = arith.mulf %40, %41 : vector<1x512xf32>
    %cst_18 = arith.constant 9.99999993E-9 : f32
    %43 = vector.broadcast %cst_18 : f32 to vector<1x512xf32>
    %44 = arith.addf %42, %43 : vector<1x512xf32>
    %45 = math.rsqrt %44 : vector<1x512xf32>
    %46 = vector.broadcast %45 : vector<1x512xf32> to vector<8x512xf32>
    %47 = arith.mulf %37, %46 : vector<8x512xf32>
    %48 = vector.extract_strided_slice %47 {offsets = [0, 0], sizes = [8, 384], strides = [1, 1]} : vector<8x512xf32> to vector<8x384xf32>
    %49 = vector.extract_strided_slice %47 {offsets = [0, 1], sizes = [8, 384], strides = [1, 1]} : vector<8x512xf32> to vector<8x384xf32>
    %50 = vector.extract_strided_slice %47 {offsets = [0, 2], sizes = [8, 384], strides = [1, 1]} : vector<8x512xf32> to vector<8x384xf32>
    %51 = vector.extract_strided_slice %47 {offsets = [0, 18], sizes = [8, 384], strides = [1, 1]} : vector<8x512xf32> to vector<8x384xf32>
    %52 = vector.extract_strided_slice %47 {offsets = [0, 19], sizes = [8, 384], strides = [1, 1]} : vector<8x512xf32> to vector<8x384xf32>
    %53 = vector.extract_strided_slice %47 {offsets = [0, 20], sizes = [8, 384], strides = [1, 1]} : vector<8x512xf32> to vector<8x384xf32>
    %54 = vector.extract_strided_slice %47 {offsets = [0, 36], sizes = [8, 384], strides = [1, 1]} : vector<8x512xf32> to vector<8x384xf32>
    %55 = vector.extract_strided_slice %47 {offsets = [0, 37], sizes = [8, 384], strides = [1, 1]} : vector<8x512xf32> to vector<8x384xf32>
    %56 = vector.extract_strided_slice %47 {offsets = [0, 38], sizes = [8, 384], strides = [1, 1]} : vector<8x512xf32> to vector<8x384xf32>
    %57 = tpu.concatenate %48, %49, %50, %51, %52, %53, %54, %55, %56 in 0 : vector<8x384xf32>, vector<8x384xf32>, vector<8x384xf32>, vector<8x384xf32>, vector<8x384xf32>, vector<8x384xf32>, vector<8x384xf32>, vector<8x384xf32>, vector<8x384xf32> -> vector<72x384xf32>
    %58 = arith.truncf %57 : vector<72x384xf32> to vector<72x384xbf16>
    %cst_19 = arith.constant dense<0.000000e+00> : vector<8x384xf32>
    %59 = tpu.matmul %0, %58, %cst_19 {dimension_numbers = #tpu.dot_dimension_numbers<[1], [0], [0], [1], [0, 0, 1, 1], [], []>} : vector<8x72xbf16>, vector<72x384xbf16>, vector<8x384xf32> -> vector<8x384xf32>
    %60 = vector.broadcast %1 : vector<8x1xf32> to vector<8x384xf32>
    %61 = arith.addf %59, %60 : vector<8x384xf32>
    %cst_20 = arith.constant 0.000000e+00 : f32
    %62 = vector.broadcast %cst_20 : f32 to vector<8x384xf32>
    %63 = arith.cmpf oge, %61, %62 : vector<8x384xf32>
    %cst_21 = arith.constant 2.000000e-01 : f32
    %64 = vector.broadcast %cst_21 : f32 to vector<8x384xf32>
    %65 = arith.mulf %64, %61 : vector<8x384xf32>
    %66 = arith.select %63, %61, %65 : vector<8x384xi1>, vector<8x384xf32>
    %c1_22 = arith.constant 1 : index
    %c0_23 = arith.constant 0 : index
    %c0_24 = arith.constant 0 : index
    %67 = vector.load %arg4[%c1_22, %c0_23, %c0_24] : memref<2x8x384xf32, #tpu.memory_space<vmem>>, vector<1x8x384xf32>
    %68 = vector.shape_cast %67 : vector<1x8x384xf32> to vector<8x384xf32>
    %69 = vector.shape_cast %66 : vector<8x384xf32> to vector<1x8x384xf32>
    tpu.vector_store %arg4[%c1_22, %c0_23, %c0_24], %69 {strides = array<i32>} : memref<2x8x384xf32, #tpu.memory_space<vmem>>, vector<1x8x384xf32>,
    return
  }
  func.func @transform_0(%arg0: i32) -> (i32, i32, i32) {
    %c0_i32 = arith.constant 0 : i32
    %c0_i32_0 = arith.constant 0 : i32
    %c0_i32_1 = arith.constant 0 : i32
    return %arg0, %c0_i32, %c0_i32_0 : i32, i32, i32
  }
  func.func @transform_1(%arg0: i32) -> (i32, i32) {
    %c0_i32 = arith.constant 0 : i32
    %c0_i32_0 = arith.constant 0 : i32
    %c0_i32_1 = arith.constant 0 : i32
    return %c0_i32, %c0_i32_0 : i32, i32
  }
  func.func @transform_2(%arg0: i32) -> (i32, i32) {
    %c0_i32 = arith.constant 0 : i32
    %c0_i32_0 = arith.constant 0 : i32
    %c0_i32_1 = arith.constant 0 : i32
    return %c0_i32, %c0_i32_0 : i32, i32
  }
  func.func @transform_3(%arg0: i32) -> (i32, i32, i32) {
    %c0_i32 = arith.constant 0 : i32
    %c0_i32_0 = arith.constant 0 : i32
    %c0_i32_1 = arith.constant 0 : i32
    return %arg0, %c0_i32, %c0_i32_0 : i32, i32, i32
  }
}

</mosaic_0001>

<llo_original>
// kernel: tpu_custom_call.1
$region0: #{tpu_custom_call.1}
  #allocation0 [shape = 'u32[]', space=smem, size = 0x4, offset = 0x4, fixed_abs, tag = 'smem constant byte address 0x4 - core index']
  #allocation1 [shape = 'u32[144,128]{1,0:T(1,128)}', space=vmem, size = 0x12000, scoped, tag = 'internal scratch']
  %s0 = inlined_call_operand.hbm [shape: f32[2,8,512], index: 0, kind: input, shape index: {}]
  %s1 = inlined_call_operand.vmem [shape: bf16[8,72], index: 1, kind: input, shape index: {}]
  %s2 = inlined_call_operand.vmem [shape: f32[8,1], index: 2, kind: input, shape index: {}]
  %s3 = inlined_call_operand.hbm [shape: f32[2,8,384], index: 3, kind: output, shape index: {}]
  %s4 = sld [smem:[#allocation0]]
  $region26: #{tpu_custom_call.1} parent=0
    _
  %s6 = ssub.s32 1, %s4
  %s7 = scalar_select 0, %s6, %s4
  $region1: #{tpu_custom_call.1} parent=0
    #allocation2 [shape = 'u8[32768]{0}', space=vmem, size = 0x8000, scoped, tag = 'input window, operand 0, single buffered']
    #allocation3 [shape = 's32[1]{0}', space=sflag, size = 0x4, scoped, tag = 'scoped memory for tpu_custom_call.1']
    #allocation4 [shape = 's32[1]{0}', space=sflag, size = 0x4, scoped, tag = 'scoped memory for tpu_custom_call.1']
    #allocation5 [shape = 'u8[24576]{0}', space=vmem, size = 0x6000, scoped, tag = 'output window, operand 0, single buffered']
    %8 = vsyncpa [#allocation3], 0
    %9 = vsyncpa [#allocation4], 0
    // Predicated region
    $region2: #{tpu_custom_call.1} parent=1 // pred_check
      _
    $region3: #{tpu_custom_call.1} parent=1 // pred_check_branch
      %11 = sbr.rel (0) target = $region5
    $region4: #{tpu_custom_call.1} parent=1 // pred_region
      %s13 = ssub.s32 1024, 1024
      %14 = vsyncadd [#allocation3], %s13
      %s15 = sshll.u32 [#allocation2], 4
      %s16 = int_to_ptr.vmem [resolvable:$true] %s15
      %21 = dma.hbm_to_vmem [thread:$0]  %s0, 1024, %s16, [#allocation3], 512, 512, 32
    $region5: #{tpu_custom_call.1} parent=1 // pred_fallthru
      _
    // Predicated region
    $region6: #{tpu_custom_call.1} parent=1 // pred_check
      _
    $region7: #{tpu_custom_call.1} parent=1 // pred_check_branch
      %23 = sbr.rel (0) target = $region9
    $region8: #{tpu_custom_call.1} parent=1 // pred_region
      _
    $region9: #{tpu_custom_call.1} parent=1 // pred_fallthru
      _
    // Predicated region
    $region10: #{tpu_custom_call.1} parent=1 // pred_check
      _
    $region11: #{tpu_custom_call.1} parent=1 // pred_check_branch
      %25 = sbr.rel (0) target = $region13
    $region12: #{tpu_custom_call.1} parent=1 // pred_region
      _
    $region13: #{tpu_custom_call.1} parent=1 // pred_fallthru
      _
    // Predicated region
    $region14: #{tpu_custom_call.1} parent=1 // pred_check
      _
    $region15: #{tpu_custom_call.1} parent=1 // pred_check_branch
      %27 = sbr.rel (0) target = $region17
    $region16: #{tpu_custom_call.1} parent=1 // pred_region
      %28 = dma.done [#allocation3], 1024
    $region17: #{tpu_custom_call.1} parent=1 // pred_fallthru
      _
    %v30 = vld [vmem:[%s1] sm:$0xf]
    %v31 = vld [vmem:[%s2] sm:$0xff]
    %v32 = vld [vmem:[#allocation2] sm:$0xff]
    %v33 = vld [vmem:[#allocation2 + $0x8] sm:$0xff]
    %v34 = vld [vmem:[#allocation2 + $0x10] sm:$0xff]
    %v35 = vld [vmem:[#allocation2 + $0x18] sm:$0xff]
    %v36 = vmul.f32 %v32, %v32
    %v37 = vmul.f32 %v33, %v33
    %v38 = vmul.f32 %v34, %v34
    %v39 = vmul.f32 %v35, %v35
    %v40 = vrot.slane %v36, 4
    %v41 = vadd.f32 %v36, %v40
    %v42 = vrot.slane %v41, 2
    %v43 = vadd.f32 %v41, %v42
    %v44 = vrot.slane %v43, 1
    %v45 = vadd.f32 %v43, %v44
    %v46 = vrot.slane %v37, 4
    %v47 = vadd.f32 %v37, %v46
    %v48 = vrot.slane %v47, 2
    %v49 = vadd.f32 %v47, %v48
    %v50 = vrot.slane %v49, 1
    %v51 = vadd.f32 %v49, %v50
    %v52 = vrot.slane %v38, 4
    %v53 = vadd.f32 %v38, %v52
    %v54 = vrot.slane %v53, 2
    %v55 = vadd.f32 %v53, %v54
    %v56 = vrot.slane %v55, 1
    %v57 = vadd.f32 %v55, %v56
    %v58 = vrot.slane %v39, 4
    %v59 = vadd.f32 %v39, %v58
    %v60 = vrot.slane %v59, 2
    %v61 = vadd.f32 %v59, %v60
    %v62 = vrot.slane %v61, 1
    %v63 = vadd.f32 %v61, %v62
    %v64 = vmul.f32 %v45, 0.25
    %v65 = vmul.f32 %v51, 0.25
    %v66 = vmul.f32 %v57, 0.25
    %v67 = vmul.f32 %v63, 0.25
    %v68 = vadd.f32 %v64, 1e-08
    %v69 = vadd.f32 %v65, 1e-08
    %v70 = vadd.f32 %v66, 1e-08
    %v71 = vadd.f32 %v67, 1e-08
    %v72 = vrsqrt.pop %v68
    %v73 = vrsqrt.pop %v69
    %v74 = vrsqrt.pop %v70
    %v75 = vrsqrt.pop %v71
    %v76 = vmul.f32 %v32, %v72
    %v77 = vmul.f32 %v33, %v73
    %v78 = vmul.f32 %v34, %v74
    %v79 = vmul.f32 %v35, %v75
    %84 = vrot.lane.b32.xlu0 %v76, 127
    %v85 = vpop.permute.xlu0 %84
    %86 = vrot.lane.b32.xlu0 %v77, 127
    %v87 = vpop.permute.xlu0 %86
    %88 = vrot.lane.b32.xlu0 %v78, 127
    %v89 = vpop.permute.xlu0 %88
    %90 = vrot.lane.b32.xlu0 %v79, 127
    %v91 = vpop.permute.xlu0 %90
    %vm92 = vcmask 1039360
    %v93 = vsel %vm92, %v85, %v87
    %v94 = vsel %vm92, %v87, %v89
    %v95 = vsel %vm92, %v89, %v91
    %99 = vrot.lane.b32.xlu0 %v76, 126
    %v100 = vpop.permute.xlu0 %99
    %101 = vrot.lane.b32.xlu0 %v77, 126
    %v102 = vpop.permute.xlu0 %101
    %103 = vrot.lane.b32.xlu0 %v78, 126
    %v104 = vpop.permute.xlu0 %103
    %105 = vrot.lane.b32.xlu0 %v79, 126
    %v106 = vpop.permute.xlu0 %105
    %vm107 = vcmask 1031168
    %v108 = vsel %vm107, %v100, %v102
    %v109 = vsel %vm107, %v102, %v104
    %v110 = vsel %vm107, %v104, %v106
    %114 = vrot.lane.b32.xlu0 %v76, 110
    %v115 = vpop.permute.xlu0 %114
    %116 = vrot.lane.b32.xlu0 %v77, 110
    %v117 = vpop.permute.xlu0 %116
    %118 = vrot.lane.b32.xlu0 %v78, 110
    %v119 = vpop.permute.xlu0 %118
    %120 = vrot.lane.b32.xlu0 %v79, 110
    %v121 = vpop.permute.xlu0 %120
    %vm122 = vcmask 900096
    %v123 = vsel %vm122, %v115, %v117
    %v124 = vsel %vm122, %v117, %v119
    %v125 = vsel %vm122, %v119, %v121
    %129 = vrot.lane.b32.xlu0 %v76, 109
    %v130 = vpop.permute.xlu0 %129
    %131 = vrot.lane.b32.xlu0 %v77, 109
    %v132 = vpop.permute.xlu0 %131
    %133 = vrot.lane.b32.xlu0 %v78, 109
    %v134 = vpop.permute.xlu0 %133
    %135 = vrot.lane.b32.xlu0 %v79, 109
    %v136 = vpop.permute.xlu0 %135
    %vm137 = vcmask 891904
    %v138 = vsel %vm137, %v130, %v132
    %v139 = vsel %vm137, %v132, %v134
    %v140 = vsel %vm137, %v134, %v136
    %144 = vrot.lane.b32.xlu0 %v76, 108
    %v145 = vpop.permute.xlu0 %144
    %146 = vrot.lane.b32.xlu0 %v77, 108
    %v147 = vpop.permute.xlu0 %146
    %148 = vrot.lane.b32.xlu0 %v78, 108
    %v149 = vpop.permute.xlu0 %148
    %150 = vrot.lane.b32.xlu0 %v79, 108
    %v151 = vpop.permute.xlu0 %150
    %vm152 = vcmask 883712
    %v153 = vsel %vm152, %v145, %v147
    %v154 = vsel %vm152, %v147, %v149
    %v155 = vsel %vm152, %v149, %v151
    %159 = vrot.lane.b32.xlu0 %v76, 92
    %v160 = vpop.permute.xlu0 %159
    %161 = vrot.lane.b32.xlu0 %v77, 92
    %v162 = vpop.permute.xlu0 %161
    %163 = vrot.lane.b32.xlu0 %v78, 92
    %v164 = vpop.permute.xlu0 %163
    %165 = vrot.lane.b32.xlu0 %v79, 92
    %v166 = vpop.permute.xlu0 %165
    %vm167 = vcmask 752640
    %v168 = vsel %vm167, %v160, %v162
    %v169 = vsel %vm167, %v162, %v164
    %v170 = vsel %vm167, %v164, %v166
    %174 = vrot.lane.b32.xlu0 %v76, 91
    %v175 = vpop.permute.xlu0 %174
    %176 = vrot.lane.b32.xlu0 %v77, 91
    %v177 = vpop.permute.xlu0 %176
    %178 = vrot.lane.b32.xlu0 %v78, 91
    %v179 = vpop.permute.xlu0 %178
    %180 = vrot.lane.b32.xlu0 %v79, 91
    %v181 = vpop.permute.xlu0 %180
    %vm182 = vcmask 744448
    %v183 = vsel %vm182, %v175, %v177
    %v184 = vsel %vm182, %v177, %v179
    %v185 = vsel %vm182, %v179, %v181
    %189 = vrot.lane.b32.xlu0 %v76, 90
    %v190 = vpop.permute.xlu0 %189
    %191 = vrot.lane.b32.xlu0 %v77, 90
    %v192 = vpop.permute.xlu0 %191
    %193 = vrot.lane.b32.xlu0 %v78, 90
    %v194 = vpop.permute.xlu0 %193
    %195 = vrot.lane.b32.xlu0 %v79, 90
    %v196 = vpop.permute.xlu0 %195
    %vm197 = vcmask 736256
    %v198 = vsel %vm197, %v190, %v192
    %v199 = vsel %vm197, %v192, %v194
    %v200 = vsel %vm197, %v194, %v196
    %v204 = vpack.c.bf16 %v93, %v76
    %v205 = vpack.c.bf16 %v94, %v77
    %v206 = vpack.c.bf16 %v95, %v78
    %v207 = vpack.c.bf16 %v123, %v108
    %v208 = vpack.c.bf16 %v124, %v109
    %v209 = vpack.c.bf16 %v125, %v110
    %v210 = vpack.c.bf16 %v153, %v138
    %v211 = vpack.c.bf16 %v154, %v139
    %v212 = vpack.c.bf16 %v155, %v140
    %v213 = vpack.c.bf16 %v183, %v168
    %v214 = vpack.c.bf16 %v184, %v169
    %v215 = vpack.c.bf16 %v185, %v170
    %v216 = vpack.c.bf16 %v198, %v198
    %v217 = vpack.c.bf16 %v199, %v199
    %v218 = vpack.c.bf16 %v200, %v200
    %220 = vset.pattern.permute.xlu0 0
    %221 = vperm.xlu0 %220, %v31
    %v222 = vpop.permute.xlu0 %221
    %vm224 = vcmask 588800
    %v226 = vsel %vm224, %v30, 0
    %vm228 = vcmask 1043456
    %v230 = vsel %vm228, %v216, 0
    %v233 = vsel %vm228, %v217, 0
    %v236 = vsel %vm228, %v218, 0
    %238 = vmatprep.subr.bf16.mxu0 0
    %239 = vmatpush1.bf16.msra.mxu0 0
    %240 = vmatprep.subr.bf16.mxu0 0
    %241 = vmatpush1.bf16.msra.mxu0 0
    %242 = vmatprep.subr.bf16.mxu0 0
    %243 = vmatpush1.bf16.msra.mxu0 0
    %244 = vmatprep.subr.bf16.mxu0 %v233
    %245 = vmatpush1.bf16.msra.mxu0 %v230
    %246 = vmatprep.subr.bf16.mxu0 %v214
    %247 = vmatpush1.bf16.msra.mxu0 %v213
    %248 = vmatprep.subr.bf16.mxu0 %v211
    %249 = vmatpush1.bf16.msra.mxu0 %v210
    %250 = vmatprep.subr.bf16.mxu0 %v208
    %251 = vmatpush1.bf16.msra.mxu0 %v207
    %252 = vmatprep.subr.bf16.mxu0 %v205
    %253 = vmatpush1.bf16.msra.mxu0 %v204
    %254 = vmatprep.subr.bf16.mxu0 0
    %255 = vmatpush2.bf16.msra.mxu0 0
    %256 = vmatprep.subr.bf16.mxu0 0
    %257 = vmatpush2.bf16.msra.mxu0 0
    %258 = vmatprep.subr.bf16.mxu0 0
    %259 = vmatpush2.bf16.msra.mxu0 0
    %260 = vmatprep.subr.bf16.mxu0 0
    %261 = vmatpush2.bf16.msra.mxu0 0
    %262 = vmatprep.subr.bf16.mxu0 0
    %263 = vmatpush2.bf16.msra.mxu0 0
    %264 = vmatprep.subr.bf16.mxu0 0
    %265 = vmatpush2.bf16.msra.mxu0 0
    %266 = vmatprep.subr.bf16.mxu0 0
    %267 = vmatpush2.bf16.msra.mxu0 0
    %268 = vmatprep.subr.bf16.mxu0 0
    %269 = vmatpush2.bf16.msra.mxu0 0
    %270 = vmatprep.mubr.bf16.mxu0 0
    %271 = vmatmul.mubr.bf16.gmra.mxu0 %v226
    %v272 = vpop.f32.mrf.mxu0
    %v273 = vadd.f32 %v222, %v272
    %v274 = vpop.f32.mrf.mxu0
    %v275 = vadd.f32 %v222, %v274
    %v276 = vpop.f32.mrf.mxu0
    %v277 = vpop.f32.mrf.mxu0
    %278 = vdwg.mxu0
    %279 = vmatprep.subr.bf16.mxu0 0
    %280 = vmatpush1.bf16.msra.mxu0 0
    %281 = vmatprep.subr.bf16.mxu0 0
    %282 = vmatpush1.bf16.msra.mxu0 0
    %283 = vmatprep.subr.bf16.mxu0 0
    %284 = vmatpush1.bf16.msra.mxu0 0
    %285 = vmatprep.subr.bf16.mxu0 0
    %286 = vmatpush1.bf16.msra.mxu0 %v236
    %287 = vmatprep.subr.bf16.mxu0 0
    %288 = vmatpush1.bf16.msra.mxu0 %v215
    %289 = vmatprep.subr.bf16.mxu0 0
    %290 = vmatpush1.bf16.msra.mxu0 %v212
    %291 = vmatprep.subr.bf16.mxu0 0
    %292 = vmatpush1.bf16.msra.mxu0 %v209
    %293 = vmatprep.subr.bf16.mxu0 0
    %294 = vmatpush1.bf16.msra.mxu0 %v206
    %295 = vmatprep.subr.bf16.mxu0 0
    %296 = vmatpush2.bf16.msra.mxu0 0
    %297 = vmatprep.subr.bf16.mxu0 0
    %298 = vmatpush2.bf16.msra.mxu0 0
    %299 = vmatprep.subr.bf16.mxu0 0
    %300 = vmatpush2.bf16.msra.mxu0 0
    %301 = vmatprep.subr.bf16.mxu0 0
    %302 = vmatpush2.bf16.msra.mxu0 0
    %303 = vmatprep.subr.bf16.mxu0 0
    %304 = vmatpush2.bf16.msra.mxu0 0
    %305 = vmatprep.subr.bf16.mxu0 0
    %306 = vmatpush2.bf16.msra.mxu0 0
    %307 = vmatprep.subr.bf16.mxu0 0
    %308 = vmatpush2.bf16.msra.mxu0 0
    %309 = vmatprep.subr.bf16.mxu0 0
    %310 = vmatpush2.bf16.msra.mxu0 0
    %311 = vmatprep.mubr.bf16.mxu0 0
    %312 = vmatmul.mubr.bf16.gmra.mxu0 %v226
    %v313 = vpop.f32.mrf.mxu0
    %v314 = vadd.f32 %v222, %v313
    %v315 = vpop.f32.mrf.mxu0
    %v316 = vpop.f32.mrf.mxu0
    %v317 = vpop.f32.mrf.mxu0
    %318 = vdwg.mxu0
    %vm319 = vcmp.ge.f32.partialorder %v273, 0.0
    %vm320 = vcmp.ge.f32.partialorder %v275, 0.0
    %vm321 = vcmp.ge.f32.partialorder %v314, 0.0
    %v322 = vmul.f32 %v273, 0.2
    %v323 = vmul.f32 %v275, 0.2
    %v324 = vmul.f32 %v314, 0.2
    %v325 = vsel %vm319, %v273, %v322
    %v326 = vsel %vm320, %v275, %v323
    %v327 = vsel %vm321, %v314, %v324
    %328 = vst [vmem:[#allocation5] sm:$0xff] %v325
    %329 = vst [vmem:[#allocation5 + $0x8] sm:$0xff] %v326
    %330 = vst [vmem:[#allocation5 + $0x10] sm:$0xff] %v327
    %s331 = scalar_lea.vmem [#allocation2], 32
    %v332 = vld [vmem:[%s331] sm:$0xff]
    %v333 = vld [vmem:[%s331 + $0x8] sm:$0xff]
    %v334 = vld [vmem:[%s331 + $0x10] sm:$0xff]
    %v335 = vld [vmem:[%s331 + $0x18] sm:$0xff]
    %v336 = vmul.f32 %v332, %v332
    %v337 = vmul.f32 %v333, %v333
    %v338 = vmul.f32 %v334, %v334
    %v339 = vmul.f32 %v335, %v335
    %v340 = vrot.slane %v336, 4
    %v341 = vadd.f32 %v336, %v340
    %v342 = vrot.slane %v341, 2
    %v343 = vadd.f32 %v341, %v342
    %v344 = vrot.slane %v343, 1
    %v345 = vadd.f32 %v343, %v344
    %v346 = vrot.slane %v337, 4
    %v347 = vadd.f32 %v337, %v346
    %v348 = vrot.slane %v347, 2
    %v349 = vadd.f32 %v347, %v348
    %v350 = vrot.slane %v349, 1
    %v351 = vadd.f32 %v349, %v350
    %v352 = vrot.slane %v338, 4
    %v353 = vadd.f32 %v338, %v352
    %v354 = vrot.slane %v353, 2
    %v355 = vadd.f32 %v353, %v354
    %v356 = vrot.slane %v355, 1
    %v357 = vadd.f32 %v355, %v356
    %v358 = vrot.slane %v339, 4
    %v359 = vadd.f32 %v339, %v358
    %v360 = vrot.slane %v359, 2
    %v361 = vadd.f32 %v359, %v360
    %v362 = vrot.slane %v361, 1
    %v363 = vadd.f32 %v361, %v362
    %v364 = vmul.f32 %v345, 0.25
    %v365 = vmul.f32 %v351, 0.25
    %v366 = vmul.f32 %v357, 0.25
    %v367 = vmul.f32 %v363, 0.25
    %v368 = vadd.f32 %v364, 1e-08
    %v369 = vadd.f32 %v365, 1e-08
    %v370 = vadd.f32 %v366, 1e-08
    %v371 = vadd.f32 %v367, 1e-08
    %v372 = vrsqrt.pop %v368
    %v373 = vrsqrt.pop %v369
    %v374 = vrsqrt.pop %v370
    %v375 = vrsqrt.pop %v371
    %v376 = vmul.f32 %v332, %v372
    %v377 = vmul.f32 %v333, %v373
    %v378 = vmul.f32 %v334, %v374
    %v379 = vmul.f32 %v335, %v375
    %384 = vrot.lane.b32.xlu0 %v376, 127
    %v385 = vpop.permute.xlu0 %384
    %386 = vrot.lane.b32.xlu0 %v377, 127
    %v387 = vpop.permute.xlu0 %386
    %388 = vrot.lane.b32.xlu0 %v378, 127
    %v389 = vpop.permute.xlu0 %388
    %390 = vrot.lane.b32.xlu0 %v379, 127
    %v391 = vpop.permute.xlu0 %390
    %v392 = vsel %vm92, %v385, %v387
    %v393 = vsel %vm92, %v387, %v389
    %v394 = vsel %vm92, %v389, %v391
    %398 = vrot.lane.b32.xlu0 %v376, 126
    %v399 = vpop.permute.xlu0 %398
    %400 = vrot.lane.b32.xlu0 %v377, 126
    %v401 = vpop.permute.xlu0 %400
    %402 = vrot.lane.b32.xlu0 %v378, 126
    %v403 = vpop.permute.xlu0 %402
    %404 = vrot.lane.b32.xlu0 %v379, 126
    %v405 = vpop.permute.xlu0 %404
    %v406 = vsel %vm107, %v399, %v401
    %v407 = vsel %vm107, %v401, %v403
    %v408 = vsel %vm107, %v403, %v405
    %412 = vrot.lane.b32.xlu0 %v376, 110
    %v413 = vpop.permute.xlu0 %412
    %414 = vrot.lane.b32.xlu0 %v377, 110
    %v415 = vpop.permute.xlu0 %414
    %416 = vrot.lane.b32.xlu0 %v378, 110
    %v417 = vpop.permute.xlu0 %416
    %418 = vrot.lane.b32.xlu0 %v379, 110
    %v419 = vpop.permute.xlu0 %418
    %v420 = vsel %vm122, %v413, %v415
    %v421 = vsel %vm122, %v415, %v417
    %v422 = vsel %vm122, %v417, %v419
    %426 = vrot.lane.b32.xlu0 %v376, 109
    %v427 = vpop.permute.xlu0 %426
    %428 = vrot.lane.b32.xlu0 %v377, 109
    %v429 = vpop.permute.xlu0 %428
    %430 = vrot.lane.b32.xlu0 %v378, 109
    %v431 = vpop.permute.xlu0 %430
    %432 = vrot.lane.b32.xlu0 %v379, 109
    %v433 = vpop.permute.xlu0 %432
    %v434 = vsel %vm137, %v427, %v429
    %v435 = vsel %vm137, %v429, %v431
    %v436 = vsel %vm137, %v431, %v433
    %440 = vrot.lane.b32.xlu0 %v376, 108
    %v441 = vpop.permute.xlu0 %440
    %442 = vrot.lane.b32.xlu0 %v377, 108
    %v443 = vpop.permute.xlu0 %442
    %444 = vrot.lane.b32.xlu0 %v378, 108
    %v445 = vpop.permute.xlu0 %444
    %446 = vrot.lane.b32.xlu0 %v379, 108
    %v447 = vpop.permute.xlu0 %446
    %v448 = vsel %vm152, %v441, %v443
    %v449 = vsel %vm152, %v443, %v445
    %v450 = vsel %vm152, %v445, %v447
    %454 = vrot.lane.b32.xlu0 %v376, 92
    %v455 = vpop.permute.xlu0 %454
    %456 = vrot.lane.b32.xlu0 %v377, 92
    %v457 = vpop.permute.xlu0 %456
    %458 = vrot.lane.b32.xlu0 %v378, 92
    %v459 = vpop.permute.xlu0 %458
    %460 = vrot.lane.b32.xlu0 %v379, 92
    %v461 = vpop.permute.xlu0 %460
    %v462 = vsel %vm167, %v455, %v457
    %v463 = vsel %vm167, %v457, %v459
    %v464 = vsel %vm167, %v459, %v461
    %468 = vrot.lane.b32.xlu0 %v376, 91
    %v469 = vpop.permute.xlu0 %468
    %470 = vrot.lane.b32.xlu0 %v377, 91
    %v471 = vpop.permute.xlu0 %470
    %472 = vrot.lane.b32.xlu0 %v378, 91
    %v473 = vpop.permute.xlu0 %472
    %474 = vrot.lane.b32.xlu0 %v379, 91
    %v475 = vpop.permute.xlu0 %474
    %v476 = vsel %vm182, %v469, %v471
    %v477 = vsel %vm182, %v471, %v473
    %v478 = vsel %vm182, %v473, %v475
    %482 = vrot.lane.b32.xlu0 %v376, 90
    %v483 = vpop.permute.xlu0 %482
    %484 = vrot.lane.b32.xlu0 %v377, 90
    %v485 = vpop.permute.xlu0 %484
    %486 = vrot.lane.b32.xlu0 %v378, 90
    %v487 = vpop.permute.xlu0 %486
    %488 = vrot.lane.b32.xlu0 %v379, 90
    %v489 = vpop.permute.xlu0 %488
    %v490 = vsel %vm197, %v483, %v485
    %v491 = vsel %vm197, %v485, %v487
    %v492 = vsel %vm197, %v487, %v489
    %v496 = vpack.c.bf16 %v392, %v376
    %v497 = vpack.c.bf16 %v393, %v377
    %v498 = vpack.c.bf16 %v394, %v378
    %v499 = vpack.c.bf16 %v420, %v406
    %v500 = vpack.c.bf16 %v421, %v407
    %v501 = vpack.c.bf16 %v422, %v408
    %v502 = vpack.c.bf16 %v448, %v434
    %v503 = vpack.c.bf16 %v449, %v435
    %v504 = vpack.c.bf16 %v450, %v436
    %v505 = vpack.c.bf16 %v476, %v462
    %v506 = vpack.c.bf16 %v477, %v463
    %v507 = vpack.c.bf16 %v478, %v464
    %v508 = vpack.c.bf16 %v490, %v490
    %v509 = vpack.c.bf16 %v491, %v491
    %v510 = vpack.c.bf16 %v492, %v492
    %v512 = vsel %vm228, %v508, 0
    %v515 = vsel %vm228, %v509, 0
    %v518 = vsel %vm228, %v510, 0
    %520 = vmatprep.subr.bf16.mxu0 0
    %521 = vmatpush1.bf16.msra.mxu0 0
    %522 = vmatprep.subr.bf16.mxu0 0
    %523 = vmatpush1.bf16.msra.mxu0 0
    %524 = vmatprep.subr.bf16.mxu0 0
    %525 = vmatpush1.bf16.msra.mxu0 0
    %526 = vmatprep.subr.bf16.mxu0 %v515
    %527 = vmatpush1.bf16.msra.mxu0 %v512
    %528 = vmatprep.subr.bf16.mxu0 %v506
    %529 = vmatpush1.bf16.msra.mxu0 %v505
    %530 = vmatprep.subr.bf16.mxu0 %v503
    %531 = vmatpush1.bf16.msra.mxu0 %v502
    %532 = vmatprep.subr.bf16.mxu0 %v500
    %533 = vmatpush1.bf16.msra.mxu0 %v499
    %534 = vmatprep.subr.bf16.mxu0 %v497
    %535 = vmatpush1.bf16.msra.mxu0 %v496
    %536 = vmatprep.subr.bf16.mxu0 0
    %537 = vmatpush2.bf16.msra.mxu0 0
    %538 = vmatprep.subr.bf16.mxu0 0
    %539 = vmatpush2.bf16.msra.mxu0 0
    %540 = vmatprep.subr.bf16.mxu0 0
    %541 = vmatpush2.bf16.msra.mxu0 0
    %542 = vmatprep.subr.bf16.mxu0 0
    %543 = vmatpush2.bf16.msra.mxu0 0
    %544 = vmatprep.subr.bf16.mxu0 0
    %545 = vmatpush2.bf16.msra.mxu0 0
    %546 = vmatprep.subr.bf16.mxu0 0
    %547 = vmatpush2.bf16.msra.mxu0 0
    %548 = vmatprep.subr.bf16.mxu0 0
    %549 = vmatpush2.bf16.msra.mxu0 0
    %550 = vmatprep.subr.bf16.mxu0 0
    %551 = vmatpush2.bf16.msra.mxu0 0
    %552 = vmatprep.mubr.bf16.mxu0 0
    %553 = vmatmul.mubr.bf16.gmra.mxu0 %v226
    %v554 = vpop.f32.mrf.mxu0
    %v555 = vadd.f32 %v222, %v554
    %v556 = vpop.f32.mrf.mxu0
    %v557 = vadd.f32 %v222, %v556
    %v558 = vpop.f32.mrf.mxu0
    %v559 = vpop.f32.mrf.mxu0
    %560 = vdwg.mxu0
    %561 = vmatprep.subr.bf16.mxu0 0
    %562 = vmatpush1.bf16.msra.mxu0 0
    %563 = vmatprep.subr.bf16.mxu0 0
    %564 = vmatpush1.bf16.msra.mxu0 0
    %565 = vmatprep.subr.bf16.mxu0 0
    %566 = vmatpush1.bf16.msra.mxu0 0
    %567 = vmatprep.subr.bf16.mxu0 0
    %568 = vmatpush1.bf16.msra.mxu0 %v518
    %569 = vmatprep.subr.bf16.mxu0 0
    %570 = vmatpush1.bf16.msra.mxu0 %v507
    %571 = vmatprep.subr.bf16.mxu0 0
    %572 = vmatpush1.bf16.msra.mxu0 %v504
    %573 = vmatprep.subr.bf16.mxu0 0
    %574 = vmatpush1.bf16.msra.mxu0 %v501
    %575 = vmatprep.subr.bf16.mxu0 0
    %576 = vmatpush1.bf16.msra.mxu0 %v498
    %577 = vmatprep.subr.bf16.mxu0 0
    %578 = vmatpush2.bf16.msra.mxu0 0
    %579 = vmatprep.subr.bf16.mxu0 0
    %580 = vmatpush2.bf16.msra.mxu0 0
    %581 = vmatprep.subr.bf16.mxu0 0
    %582 = vmatpush2.bf16.msra.mxu0 0
    %583 = vmatprep.subr.bf16.mxu0 0
    %584 = vmatpush2.bf16.msra.mxu0 0
    %585 = vmatprep.subr.bf16.mxu0 0
    %586 = vmatpush2.bf16.msra.mxu0 0
    %587 = vmatprep.subr.bf16.mxu0 0
    %588 = vmatpush2.bf16.msra.mxu0 0
    %589 = vmatprep.subr.bf16.mxu0 0
    %590 = vmatpush2.bf16.msra.mxu0 0
    %591 = vmatprep.subr.bf16.mxu0 0
    %592 = vmatpush2.bf16.msra.mxu0 0
    %593 = vmatprep.mubr.bf16.mxu0 0
    %594 = vmatmul.mubr.bf16.gmra.mxu0 %v226
    %v595 = vpop.f32.mrf.mxu0
    %v596 = vadd.f32 %v222, %v595
    %v597 = vpop.f32.mrf.mxu0
    %v598 = vpop.f32.mrf.mxu0
    %v599 = vpop.f32.mrf.mxu0
    %600 = vdwg.mxu0
    %vm601 = vcmp.ge.f32.partialorder %v555, 0.0
    %vm602 = vcmp.ge.f32.partialorder %v557, 0.0
    %vm603 = vcmp.ge.f32.partialorder %v596, 0.0
    %v604 = vmul.f32 %v555, 0.2
    %v605 = vmul.f32 %v557, 0.2
    %v606 = vmul.f32 %v596, 0.2
    %v607 = vsel %vm601, %v555, %v604
    %v608 = vsel %vm602, %v557, %v605
    %v609 = vsel %vm603, %v596, %v606
    %s610 = scalar_lea.vmem [#allocation5], 24
    %611 = vst [vmem:[%s610] sm:$0xff] %v607
    %612 = vst [vmem:[%s610 + $0x8] sm:$0xff] %v608
    %613 = vst [vmem:[%s610 + $0x10] sm:$0xff] %v609
    // Predicated region
    $region18: #{tpu_custom_call.1} parent=1 // pred_check
      _
    $region19: #{tpu_custom_call.1} parent=1 // pred_check_branch
      %615 = sbr.rel (0) target = $region21
    $region20: #{tpu_custom_call.1} parent=1 // pred_region
      %s617 = ssub.s32 768, 768
      %618 = vsyncadd [#allocation4], %s617
      %s619 = sshll.u32 [#allocation5], 4
      %s620 = int_to_ptr.vmem [resolvable:$true] %s619
      %625 = dma.vmem_to_hbm [thread:$0]  %s620, 768, %s3, [#allocation4], 384, 384, 24
    $region21: #{tpu_custom_call.1} parent=1 // pred_fallthru
      _
    // Predicated region
    $region22: #{tpu_custom_call.1} parent=1 // pred_check
      _
    $region23: #{tpu_custom_call.1} parent=1 // pred_check_branch
      %627 = sbr.rel (0) target = $region25
    $region24: #{tpu_custom_call.1} parent=1 // pred_region
      %628 = dma.done [#allocation4], 768
    $region25: #{tpu_custom_call.1} parent=1 // pred_fallthru
      _
    %629 = vsyncpa [#allocation3], 1
    %630 = vsyncpa [#allocation4], 1

</llo_original>
